<compile_context>
chip_gen: v6e
topology: v6e:2x2x1
jax: 0.10.0
libtpu: 0.0.40
codegen_flags: <defaults>
</compile_context>

<pallas_src>
import functools
import math

import jax
import jax.numpy as jnp
from jax.experimental import pallas as pl
from jax.experimental.pallas import tpu as pltpu


# ---------------------------------------------------------------------------
# Tiling helpers
# ---------------------------------------------------------------------------
def _sublane(dtype):
    # 8 rows for 4-byte, 16 for 2-byte (bf16), 32 for 1-byte dtypes.
    return max(8, 32 // jnp.dtype(dtype).itemsize)


@functools.lru_cache(maxsize=None)
def _default_target_block_bytes():
    """~4 MiB blocks on v7x-class chips, ~2 MiB on v5e/v6e.

    v7x HBM (~3.2 TB/s) makes the fixed ~0.35us per-grid-step overhead the dominant
    tax at 2 MiB; v5e/v6e (0.8-1.4 TB/s) are fine at 2 MiB.  Detection is best-effort
    (falls back to 2 MiB, e.g. in interpret mode).
    """
    try:
        kind = jax.devices()[0].device_kind.lower()
    except Exception:
        kind = ""
    if "7" in kind:
        return 4 * 1024 * 1024
    return 2 * 1024 * 1024


def _pick_row_tile(rows, features, dtype_bytes, *, sublane=8, target_bytes=None,
                   vmem_budget_bytes=24 * 1024 * 1024, n_buffers=4):
    """Row tile of ~target_bytes, multiple of the sublane tile, VMEM-budget capped.

    The cap keeps (2 input + 2 output double buffers) x block under a 24 MiB budget,
    i.e. safely under the 32 MiB default scoped VMEM on v7x (64 MiB physical) even
    for very wide feature dims, while v5e/v6e (128 MiB VMEM) are never the binding
    constraint.  No minimum-row floor beyond the sublane tile (the old 256-row floor
    could blow the v7x budget for >=4K-wide f32 features).
    """
    if target_bytes is None:
        target_bytes = _default_target_block_bytes()
    row_bytes = max(1, features * dtype_bytes)
    tile = max(sublane, target_bytes // row_bytes)
    max_tile = max(sublane, vmem_budget_bytes // (n_buffers * row_bytes))
    tile = min(tile, max_tile)
    tile = max(sublane, (tile // sublane) * sublane)
    rows_up = ((rows + sublane - 1) // sublane) * sublane
    return min(tile, rows_up)


# ---------------------------------------------------------------------------
# Shared in-kernel LayerNorm math (torch semantics, f32, two-pass, exact recip)
# ---------------------------------------------------------------------------
def _ln_rows(y, gamma, beta, *, eps, n):
    """Row-wise LayerNorm matching torch: gamma*(y-mean)/(unbiased_std+eps)+beta.

    y: (rows, n) f32; gamma/beta: (1, n) f32.
    Two-pass statistics (mean-subtract) and an exact per-row reciprocal: the
    reciprocal/divide happens once per ROW, so there is no need for the approximate
    EUP reciprocal (which previously injected ~1e-3 relative error).
    """
    mean = jnp.sum(y, axis=-1, keepdims=True) * jnp.float32(1.0 / n)
    yc = y - mean
    var = jnp.sum(yc * yc, axis=-1, keepdims=True) * jnp.float32(1.0 / (n - 1))
    std = jnp.sqrt(var)
    inv = jnp.float32(1.0) / (std + jnp.float32(eps))      # exact, per-row only
    return (yc * inv) * gamma + beta


# ---------------------------------------------------------------------------
# 1) Standalone LayerNorm kernel (the LayerNorm module)
# ---------------------------------------------------------------------------
def _layernorm_kernel(x_ref, a_ref, b_ref, o_ref, *, eps, features):
    x = x_ref[...].astype(jnp.float32)                     # (row_tile, features)
    out = _ln_rows(x, a_ref[...], b_ref[...], eps=eps, n=features)
    o_ref[...] = out.astype(o_ref.dtype)


def layer_norm(x, a_2, b_2, eps=1e-6, row_tile=None):
    """x: (..., features); a_2/b_2: (features,). Normalizes over the last axis."""
    orig_shape = x.shape
    features = orig_shape[-1]
    rows = math.prod(orig_shape[:-1])
    x2 = x.reshape(rows, features)
    a2 = a_2.astype(jnp.float32).reshape(1, features)       # pre-cast once
    b2 = b_2.astype(jnp.float32).reshape(1, features)

    dtype_bytes = jnp.dtype(x.dtype).itemsize
    sublane = _sublane(x.dtype)
    if row_tile is None:
        row_tile = _pick_row_tile(rows, features, dtype_bytes, sublane=sublane)

    grid = (pl.cdiv(rows, row_tile),)   # no host-side padding; ragged tail is masked

    kernel = functools.partial(_layernorm_kernel, eps=eps, features=features)
    out = pl.pallas_call(
        kernel,
        out_shape=jax.ShapeDtypeStruct((rows, features), x.dtype),
        grid_spec=pltpu.PrefetchScalarGridSpec(
            num_scalar_prefetch=0,
            grid=grid,
            in_specs=[
                pl.BlockSpec((row_tile, features), lambda i: (i, 0)),
                pl.BlockSpec((1, features), lambda i: (0, 0)),
                pl.BlockSpec((1, features), lambda i: (0, 0)),
            ],
            out_specs=pl.BlockSpec((row_tile, features), lambda i: (i, 0)),
        ),
        compiler_params=pltpu.CompilerParams(
            dimension_semantics=("parallel",),
        ),
        cost_estimate=pl.CostEstimate(
            flops=8 * rows * features,
            transcendentals=rows,
            bytes_accessed=2 * rows * features * dtype_bytes + 2 * features * 4,
        ),
    )(x2, a2, b2)
    return out.reshape(orig_shape)


# ---------------------------------------------------------------------------
# 2) Fused SrcEmbed + PositionalEncoding: LayerNorm(x @ W + b) + pe[:seq]
# ---------------------------------------------------------------------------
def _src_embed_pe_kernel(x_ref, w_ref, wb_ref, a_ref, b_ref, pe_ref, o_ref,
                         *, eps, d_model):
    b_tile, s_tile, in_dim = x_ref.shape
    # Flatten (batch_tile, seq_tile) into one row axis for a single big MXU matmul
    # (no-op relayout: either b_tile == 1 or seq_tile is a multiple of the sublane).
    x = x_ref[...].reshape(b_tile * s_tile, in_dim).astype(jnp.bfloat16)
    y = jnp.dot(x, w_ref[...], preferred_element_type=jnp.float32) + wb_ref[...]
    y = _ln_rows(y, a_ref[...], b_ref[...], eps=eps, n=d_model)
    y = y.reshape(b_tile, s_tile, d_model) + pe_ref[...][None]   # pe bcast over batch
    o_ref[...] = y.astype(o_ref.dtype)


def src_embed_with_pe(x, w, bias, gamma, beta, pe, *, eps=1e-6,
                      seq_tile=None, batch_tile=None):
    """x: (batch, seq, in_dim); w: (in_dim, d_model); pe: (seq, d_model)."""
    batch, seq, in_dim = x.shape
    d_model = w.shape[-1]
    w_mxu = w.astype(jnp.bfloat16)                           # native bf16 MXU path
    bias32 = bias.astype(jnp.float32).reshape(1, d_model)
    g32 = gamma.astype(jnp.float32).reshape(1, d_model)
    be32 = beta.astype(jnp.float32).reshape(1, d_model)
    pe32 = pe.astype(jnp.float32)

    x_bytes = jnp.dtype(x.dtype).itemsize
    out_bytes = x_bytes
    sublane = _sublane(x.dtype)
    rows_target = _pick_row_tile(batch * seq, in_dim + d_model, max(x_bytes, 4),
                                 sublane=sublane)

    kernel = functools.partial(_src_embed_pe_kernel, eps=eps, d_model=d_model)
    cost = pl.CostEstimate(
        flops=2 * batch * seq * in_dim * d_model + 10 * batch * seq * d_model,
        transcendentals=batch * seq,
        bytes_accessed=(batch * seq * in_dim * x_bytes          # x
                        + in_dim * d_model * 2                  # bf16 weight
                        + batch * seq * d_model * out_bytes     # output
                        + seq * d_model * 4),                   # pe
    )

    if seq <= rows_target and seq % sublane == 0:
        # Tiny sequences (demo: seq=8): block over batch too, so each grid step moves
        # a full-size block (amortizes the ~0.35us/step overhead and gives the v7x
        # megacore full-size parallel steps).  pe is broadcast across batch in-kernel.
        b_tile = batch_tile or min(batch, max(1, rows_target // seq))
        grid = (pl.cdiv(batch, b_tile),)
        in_specs = [
            pl.BlockSpec((b_tile, seq, in_dim), lambda i: (i, 0, 0)),
            pl.BlockSpec((in_dim, d_model), lambda i: (0, 0)),
            pl.BlockSpec((1, d_model), lambda i: (0, 0)),
            pl.BlockSpec((1, d_model), lambda i: (0, 0)),
            pl.BlockSpec((1, d_model), lambda i: (0, 0)),
            pl.BlockSpec((seq, d_model), lambda i: (0, 0)),
        ]
        out_specs = pl.BlockSpec((b_tile, seq, d_model), lambda i: (i, 0, 0))
    else:
        s_tile = seq_tile or min(rows_target,
                                 ((seq + sublane - 1) // sublane) * sublane)
        grid = (batch, pl.cdiv(seq, s_tile))
        in_specs = [
            pl.BlockSpec((1, s_tile, in_dim), lambda b, s: (b, s, 0)),
            pl.BlockSpec((in_dim, d_model), lambda b, s: (0, 0)),
            pl.BlockSpec((1, d_model), lambda b, s: (0, 0)),
            pl.BlockSpec((1, d_model), lambda b, s: (0, 0)),
            pl.BlockSpec((1, d_model), lambda b, s: (0, 0)),
            pl.BlockSpec((s_tile, d_model), lambda b, s: (s, 0)),
        ]
        out_specs = pl.BlockSpec((1, s_tile, d_model), lambda b, s: (b, s, 0))

    out = pl.pallas_call(
        kernel,
        out_shape=jax.ShapeDtypeStruct((batch, seq, d_model), x.dtype),
        grid_spec=pltpu.PrefetchScalarGridSpec(
            num_scalar_prefetch=0, grid=grid,
            in_specs=in_specs, out_specs=out_specs),
        compiler_params=pltpu.CompilerParams(
            dimension_semantics=("parallel",) * len(grid)),
        cost_estimate=cost,
    )(x, w_mxu, bias32, g32, be32, pe32)
    return out


# ---------------------------------------------------------------------------
# 3) Fused TranFinalLayer: sigmoid(LayerNorm(relu(x @ W1 + b1)) . w2 + b2)
#    with w2 algebraically folded into the LayerNorm:
#      s = inv*(sum(h*gamma*w2) - mean*sum(gamma*w2)) + (sum(beta*w2) + b2)
# ---------------------------------------------------------------------------
def _final_layer_kernel(x_ref, w1_ref, b1_ref, gw2_ref, gsum_ref, c_ref, o_ref,
                        *, eps, d_half):
    x = x_ref[...].astype(jnp.bfloat16)                      # (row_tile, d_model)
    h = jnp.dot(x, w1_ref[...], preferred_element_type=jnp.float32) + b1_ref[...]
    h = jnp.maximum(h, 0.0)                                  # relu -> h >= 0
    # Single-pass stats are fine here: relu output has |mean|/std ~ 0.7, so the
    # s2 - s1*mean cancellation costs <1 bit in f32 (clamped for safety).
    s1 = jnp.sum(h, axis=-1, keepdims=True)                  # (rows, 1)
    s2 = jnp.sum(h * h, axis=-1, keepdims=True)              # (rows, 1)
    d = jnp.sum(h * gw2_ref[...], axis=-1, keepdims=True)    # (rows, 1)
    mean = s1 * jnp.float32(1.0 / d_half)
    var = jnp.maximum((s2 - s1 * mean) * jnp.float32(1.0 / (d_half - 1)), 0.0)
    inv = jnp.float32(1.0) / (jnp.sqrt(var) + jnp.float32(eps))
    s = inv * (d - mean * gsum_ref[...]) + c_ref[...]        # (rows, 1)
    o_ref[...] = jax.nn.sigmoid(s).astype(o_ref.dtype)
    # NOTE: output last-dim is 1 (masked stores), but the kernel is bound by the HBM
    # read of x (d_model x more bytes), so the stores hide under the input DMA; a
    # lane-dense (1, row_tile) slab would need a sublane->lane relayout.


def tran_final_layer(x, w1, b1, gamma, beta, w2, b2, *, eps=1e-6, row_tile=None):
    """x: (..., d_model) -> (...,) scalar per position (sigmoid output)."""
    orig = x.shape
    d_model = orig[-1]
    d_half = w1.shape[-1]
    rows = math.prod(orig[:-1])
    x2 = x.reshape(rows, d_model)
    w1_mxu = w1.astype(jnp.bfloat16)                         # native bf16 MXU path
    b1_32 = b1.astype(jnp.float32).reshape(1, d_half)
    # Fold gamma/beta/w2/b2 into three small constants (done once, on the host).
    w2_col = w2.astype(jnp.float32).reshape(d_half)
    gw2 = (gamma.astype(jnp.float32) * w2_col).reshape(1, d_half)
    gsum = jnp.sum(gw2).reshape(1, 1)
    c = (jnp.sum(beta.astype(jnp.float32) * w2_col)
         + b2.astype(jnp.float32).reshape(())).reshape(1, 1)

    x_bytes = jnp.dtype(x.dtype).itemsize
    sublane = _sublane(x.dtype)
    if row_tile is None:
        row_tile = _pick_row_tile(rows, d_model, x_bytes, sublane=sublane)
    grid = (pl.cdiv(rows, row_tile),)

    kernel = functools.partial(_final_layer_kernel, eps=eps, d_half=d_half)
    out = pl.pallas_call(
        kernel,
        out_shape=jax.ShapeDtypeStruct((rows, 1), x.dtype),
        grid_spec=pltpu.PrefetchScalarGridSpec(
            num_scalar_prefetch=0,
            grid=grid,
            in_specs=[
                pl.BlockSpec((row_tile, d_model), lambda i: (i, 0)),
                pl.BlockSpec((d_model, d_half), lambda i: (0, 0)),
                pl.BlockSpec((1, d_half), lambda i: (0, 0)),
                pl.BlockSpec((1, d_half), lambda i: (0, 0)),
                pl.BlockSpec((1, 1), lambda i: (0, 0)),
                pl.BlockSpec((1, 1), lambda i: (0, 0)),
            ],
            out_specs=pl.BlockSpec((row_tile, 1), lambda i: (i, 0)),
        ),
        compiler_params=pltpu.CompilerParams(
            dimension_semantics=("parallel",),
        ),
        cost_estimate=pl.CostEstimate(
            flops=2 * rows * d_model * d_half + 8 * rows * d_half,
            transcendentals=2 * rows,
            bytes_accessed=(rows * d_model * x_bytes        # x
                            + d_model * d_half * 2          # bf16 weight
                            + rows * x_bytes                # output
                            + 3 * d_half * 4),
        ),
    )(x2, w1_mxu, b1_32, gw2, gsum, c)
    return out.reshape(orig[:-1])


# ---------------------------------------------------------------------------
# Encoder forward (inference) composed from the kernels above
# ---------------------------------------------------------------------------
def positional_encoding_table(max_len, d_model, dtype=jnp.float32):
    """Same table as PositionalEncoding.register_buffer('pe')."""
    position = jnp.arange(max_len, dtype=jnp.float32)[:, None]
    div_term = jnp.exp(jnp.arange(0, d_model, 2, dtype=jnp.float32)
                       * (-math.log(10000.0) / d_model))
    ang = position * div_term
    pe = jnp.zeros((max_len, d_model), dtype=jnp.float32)
    pe = pe.at[:, 0::2].set(jnp.sin(ang))
    pe = pe.at[:, 1::2].set(jnp.cos(ang))
    return pe.astype(dtype)


def encoder_forward(x, params, *, eps=1e-6):
    seq = x.shape[-2]
    # SrcEmbed + PositionalEncoding (dropout is identity at inference).
    h = src_embed_with_pe(x, params["src_w"], params["src_b"],
                          params["src_ln_a"], params["src_ln_b"],
                          params["pe"][:seq], eps=eps)
    # TODO(synk): the transformer `layer` passed to Encoder(...) is an external,
    # unspecified module in this file; the N cloned layers (and the unused
    # Encoder.norm) are treated as identity here.
    return tran_final_layer(h, params["f_w1"], params["f_b1"],
                            params["f_ln_a"], params["f_ln_b"],
                            params["f_w2"], params["f_b2"], eps=eps)


# ---------------------------------------------------------------------------
# Pure-JAX reference (mirrors the torch forward, all-f32) + demo
# ---------------------------------------------------------------------------
def _reference_layernorm(y, a, b, eps=1e-6):
    mean = jnp.mean(y, axis=-1, keepdims=True)
    std = jnp.sqrt(jnp.sum((y - mean) ** 2, axis=-1, keepdims=True)
                   / (y.shape[-1] - 1))                      # unbiased, like torch.std
    return a * (y - mean) / (std + eps) + b


def reference_encoder_forward(x, params, eps=1e-6):
    h = _reference_layernorm(x @ params["src_w"] + params["src_b"],
                             params["src_ln_a"], params["src_ln_b"], eps)
    h = h + params["pe"][: x.shape[-2]][None]
    h1 = jnp.maximum(h @ params["f_w1"] + params["f_b1"], 0.0)
    h1 = _reference_layernorm(h1, params["f_ln_a"], params["f_ln_b"], eps)
    s = h1 @ params["f_w2"] + params["f_b2"]
    return jax.nn.sigmoid(s)[..., 0]


if __name__ == "__main__":
    key = jax.random.PRNGKey(0)
    batch, seq, num_features, d_model = 2, 8, 32, 256
    d_half = d_model // 2
    max_len = 64

    ks = jax.random.split(key, 7)
    x = jax.random.normal(ks[0], (batch, seq, num_features), dtype=jnp.float32)

    params = {
        # SrcEmbed: Linear(num_features -> d_model) + LayerNorm(d_model)
        "src_w": jax.random.normal(ks[1], (num_features, d_model), jnp.float32)
                 * (1.0 / math.sqrt(num_features)),
        "src_b": 0.1 * jax.random.normal(ks[2], (d_model,), jnp.float32),
        "src_ln_a": jnp.ones((d_model,), jnp.float32),    # torch.ones(features)
        "src_ln_b": jnp.zeros((d_model,), jnp.float32),   # torch.zeros(features)
        # PositionalEncoding buffer
        "pe": positional_encoding_table(max_len, d_model),
        # TranFinalLayer: Linear(d_model -> d_model//2), LayerNorm, Linear(-> 1)
        "f_w1": jax.random.normal(ks[3], (d_model, d_half), jnp.float32)
                * (1.0 / math.sqrt(d_model)),
        "f_b1": 0.1 * jax.random.normal(ks[4], (d_half,), jnp.float32),
        "f_ln_a": jnp.ones((d_half,), jnp.float32),
        "f_ln_b": jnp.zeros((d_half,), jnp.float32),
        "f_w2": jax.random.normal(ks[5], (d_half, 1), jnp.float32)
                * (1.0 / math.sqrt(d_half)),
        "f_b2": jnp.zeros((1,), jnp.float32),
    }

    # Full encoder forward through the Pallas kernels.
    out = encoder_forward(x, params)
    jax.block_until_ready(out)
    assert out.shape == (batch, seq), out.shape

    ref = reference_encoder_forward(x, params)
    # Tolerance accounts for feeding the MXU matmuls bf16 inputs (f32 accumulation);
    # the reference runs fully in f32.  Observed error is well below this bound.
    assert jnp.allclose(out, ref, atol=2.5e-2, rtol=2.5e-2), (
        "encoder mismatch", float(jnp.max(jnp.abs(out - ref))))

    # Standalone LayerNorm kernel (the LayerNorm module itself): exact f32 math,
    # so the tolerance is tight.
    y = jax.random.normal(ks[6], (batch, seq, d_model), dtype=jnp.float32)
    ln_out = layer_norm(y, params["src_ln_a"], params["src_ln_b"], eps=1e-6)
    jax.block_until_ready(ln_out)
    mean = jnp.mean(y, axis=-1, keepdims=True)
    std = jnp.sqrt(jnp.sum((y - mean) ** 2, axis=-1, keepdims=True) / (d_model - 1))
    ln_ref = params["src_ln_a"] * (y - mean) / (std + 1e-6) + params["src_ln_b"]
    assert jnp.allclose(ln_out, ln_ref, atol=1e-4, rtol=1e-4), (
        "layernorm mismatch", float(jnp.max(jnp.abs(ln_out - ln_ref))))

    print("KERNEL_OK")
</pallas_src>

<mosaic_0001>
module attributes {stable_mosaic.version = 11 : i64} {
  func.func @_src_embed_pe_kernel(%arg0: i32, %arg1: memref<2x8x32xf32, #tpu.memory_space<vmem>>, %arg2: memref<32x256xbf16, #tpu.memory_space<vmem>>, %arg3: memref<1x256xf32, #tpu.memory_space<vmem>>, %arg4: memref<1x256xf32, #tpu.memory_space<vmem>>, %arg5: memref<1x256xf32, #tpu.memory_space<vmem>>, %arg6: memref<8x256xf32, #tpu.memory_space<vmem>>, %arg7: memref<2x8x256xf32, #tpu.memory_space<vmem>>) attributes {dimension_semantics = [#tpu.dimension_semantics<parallel>], iteration_bounds = array<i64: 1>, scalar_prefetch = 0 : i64, scratch_operands = 0 : i64, tpu.core_type = #tpu.core_type<tc>, window_params = [{transform_indices = @transform_0, window_bounds = array<i64: 2, 8, 32>}, {pipeline_mode = #tpu.pipeline_mode<synchronous>, transform_indices = @transform_1, window_bounds = array<i64: 32, 256>}, {pipeline_mode = #tpu.pipeline_mode<synchronous>, transform_indices = @transform_2, window_bounds = array<i64: 1, 256>}, {pipeline_mode = #tpu.pipeline_mode<synchronous>, transform_indices = @transform_3, window_bounds = array<i64: 1, 256>}, {pipeline_mode = #tpu.pipeline_mode<synchronous>, transform_indices = @transform_4, window_bounds = array<i64: 1, 256>}, {pipeline_mode = #tpu.pipeline_mode<synchronous>, transform_indices = @transform_5, window_bounds = array<i64: 8, 256>}, {transform_indices = @transform_6, window_bounds = array<i64: 2, 8, 256>}]} {
    %c0 = arith.constant 0 : index
    %c0_0 = arith.constant 0 : index
    %c0_1 = arith.constant 0 : index
    %0 = vector.load %arg1[%c0, %c0_0, %c0_1] : memref<2x8x32xf32, #tpu.memory_space<vmem>>, vector<2x8x32xf32>
    %1 = vector.shape_cast %0 : vector<2x8x32xf32> to vector<16x32xf32>
    %2 = arith.truncf %1 : vector<16x32xf32> to vector<16x32xbf16>
    %c0_2 = arith.constant 0 : index
    %c0_3 = arith.constant 0 : index
    %3 = vector.load %arg2[%c0_2, %c0_3] : memref<32x256xbf16, #tpu.memory_space<vmem>>, vector<32x256xbf16>
    %cst = arith.constant dense<0.000000e+00> : vector<16x256xf32>
    %4 = tpu.matmul %2, %3, %cst {dimension_numbers = #tpu.dot_dimension_numbers<[1], [0], [0], [1], [0, 0, 1, 1], [], []>} : vector<16x32xbf16>, vector<32x256xbf16>, vector<16x256xf32> -> vector<16x256xf32>
    %c0_4 = arith.constant 0 : index
    %c0_5 = arith.constant 0 : index
    %5 = vector.load %arg3[%c0_4, %c0_5] : memref<1x256xf32, #tpu.memory_space<vmem>>, vector<1x256xf32>
    %6 = vector.broadcast %5 : vector<1x256xf32> to vector<16x256xf32>
    %7 = arith.addf %4, %6 : vector<16x256xf32>
    %c0_6 = arith.constant 0 : index
    %c0_7 = arith.constant 0 : index
    %8 = vector.load %arg4[%c0_6, %c0_7] : memref<1x256xf32, #tpu.memory_space<vmem>>, vector<1x256xf32>
    %c0_8 = arith.constant 0 : index
    %c0_9 = arith.constant 0 : index
    %9 = vector.load %arg5[%c0_8, %c0_9] : memref<1x256xf32, #tpu.memory_space<vmem>>, vector<1x256xf32>
    %cst_10 = arith.constant dense<0.000000e+00> : vector<16xf32>
    %10 = vector.multi_reduction <add>, %7, %cst_10 [1] : vector<16x256xf32> to vector<16xf32>
    %11 = vector.shape_cast %10 : vector<16xf32> to vector<16x1xf32>
    %cst_11 = arith.constant 3.906250e-03 : f32
    %12 = vector.broadcast %cst_11 : f32 to vector<16x1xf32>
    %13 = arith.mulf %11, %12 : vector<16x1xf32>
    %14 = vector.broadcast %13 : vector<16x1xf32> to vector<16x256xf32>
    %15 = arith.subf %7, %14 : vector<16x256xf32>
    %16 = arith.mulf %15, %15 : vector<16x256xf32>
    %cst_12 = arith.constant dense<0.000000e+00> : vector<16xf32>
    %17 = vector.multi_reduction <add>, %16, %cst_12 [1] : vector<16x256xf32> to vector<16xf32>
    %18 = vector.shape_cast %17 : vector<16xf32> to vector<16x1xf32>
    %cst_13 = arith.constant 0.00392156886 : f32
    %19 = vector.broadcast %cst_13 : f32 to vector<16x1xf32>
    %20 = arith.mulf %18, %19 : vector<16x1xf32>
    %21 = math.sqrt %20 : vector<16x1xf32>
    %cst_14 = arith.constant 9.99999997E-7 : f32
    %22 = vector.broadcast %cst_14 : f32 to vector<16x1xf32>
    %23 = arith.addf %21, %22 : vector<16x1xf32>
    %cst_15 = arith.constant 1.000000e+00 : f32
    %24 = vector.broadcast %cst_15 : f32 to vector<16x1xf32>
    %25 = arith.divf %24, %23 : vector<16x1xf32>
    %26 = vector.broadcast %25 : vector<16x1xf32> to vector<16x256xf32>
    %27 = arith.mulf %15, %26 : vector<16x256xf32>
    %28 = vector.broadcast %8 : vector<1x256xf32> to vector<16x256xf32>
    %29 = arith.mulf %27, %28 : vector<16x256xf32>
    %30 = vector.broadcast %9 : vector<1x256xf32> to vector<16x256xf32>
    %31 = arith.addf %29, %30 : vector<16x256xf32>
    %32 = vector.shape_cast %31 : vector<16x256xf32> to vector<2x8x256xf32>
    %c0_16 = arith.constant 0 : index
    %c0_17 = arith.constant 0 : index
    %33 = vector.load %arg6[%c0_16, %c0_17] : memref<8x256xf32, #tpu.memory_space<vmem>>, vector<8x256xf32>
    %34 = vector.shape_cast %33 : vector<8x256xf32> to vector<1x8x256xf32>
    %35 = vector.broadcast %34 : vector<1x8x256xf32> to vector<2x8x256xf32>
    %36 = arith.addf %32, %35 : vector<2x8x256xf32>
    %c0_18 = arith.constant 0 : index
    %c0_19 = arith.constant 0 : index
    %c0_20 = arith.constant 0 : index
    %37 = vector.load %arg7[%c0_18, %c0_19, %c0_20] : memref<2x8x256xf32, #tpu.memory_space<vmem>>, vector<2x8x256xf32>
    tpu.vector_store %arg7[%c0_18, %c0_19, %c0_20], %36 {strides = array<i32>} : memref<2x8x256xf32, #tpu.memory_space<vmem>>, vector<2x8x256xf32>,
    return
  }
  func.func @transform_0(%arg0: i32) -> (i32, i32, i32) {
    %c0_i32 = arith.constant 0 : i32
    %c0_i32_0 = arith.constant 0 : i32
    %c0_i32_1 = arith.constant 0 : i32
    return %arg0, %c0_i32, %c0_i32_0 : i32, i32, i32
  }
  func.func @transform_1(%arg0: i32) -> (i32, i32) {
    %c0_i32 = arith.constant 0 : i32
    %c0_i32_0 = arith.constant 0 : i32
    %c0_i32_1 = arith.constant 0 : i32
    return %c0_i32, %c0_i32_0 : i32, i32
  }
  func.func @transform_2(%arg0: i32) -> (i32, i32) {
    %c0_i32 = arith.constant 0 : i32
    %c0_i32_0 = arith.constant 0 : i32
    %c0_i32_1 = arith.constant 0 : i32
    return %c0_i32, %c0_i32_0 : i32, i32
  }
  func.func @transform_3(%arg0: i32) -> (i32, i32) {
    %c0_i32 = arith.constant 0 : i32
    %c0_i32_0 = arith.constant 0 : i32
    %c0_i32_1 = arith.constant 0 : i32
    return %c0_i32, %c0_i32_0 : i32, i32
  }
  func.func @transform_4(%arg0: i32) -> (i32, i32) {
    %c0_i32 = arith.constant 0 : i32
    %c0_i32_0 = arith.constant 0 : i32
    %c0_i32_1 = arith.constant 0 : i32
    return %c0_i32, %c0_i32_0 : i32, i32
  }
  func.func @transform_5(%arg0: i32) -> (i32, i32) {
    %c0_i32 = arith.constant 0 : i32
    %c0_i32_0 = arith.constant 0 : i32
    %c0_i32_1 = arith.constant 0 : i32
    return %c0_i32, %c0_i32_0 : i32, i32
  }
  func.func @transform_6(%arg0: i32) -> (i32, i32, i32) {
    %c0_i32 = arith.constant 0 : i32
    %c0_i32_0 = arith.constant 0 : i32
    %c0_i32_1 = arith.constant 0 : i32
    return %arg0, %c0_i32, %c0_i32_0 : i32, i32, i32
  }
}

</mosaic_0001>

<llo_original>
// kernel: tpu_custom_call.1
$region0: #{tpu_custom_call.1}
  #allocation0 [shape = 'u32[]', space=smem, size = 0x4, offset = 0x4, fixed_abs, tag = 'smem constant byte address 0x4 - core index']
  #allocation1 [shape = 'u32[144,128]{1,0:T(1,128)}', space=vmem, size = 0x12000, scoped, tag = 'internal scratch']
  %s0 = inlined_call_operand.hbm [shape: f32[2,8,32], index: 0, kind: input, shape index: {}]
  %s1 = inlined_call_operand.hbm [shape: bf16[32,256], index: 1, kind: input, shape index: {}]
  %s2 = inlined_call_operand.vmem [shape: f32[1,256], index: 2, kind: input, shape index: {}]
  %s3 = inlined_call_operand.vmem [shape: f32[1,256], index: 3, kind: input, shape index: {}]
  %s4 = inlined_call_operand.vmem [shape: f32[1,256], index: 4, kind: input, shape index: {}]
  %s5 = inlined_call_operand.hbm [shape: f32[8,256], index: 5, kind: input, shape index: {}]
  %s6 = inlined_call_operand.hbm [shape: f32[2,8,256], index: 6, kind: output, shape index: {}]
  %s7 = sld [smem:[#allocation0]]
  $region46: #{tpu_custom_call.1} parent=0
    _
  %s9 = ssub.s32 1, %s7
  %s10 = scalar_select 0, %s9, %s7
  $region1: #{tpu_custom_call.1} parent=0
    #allocation2 [shape = 'u8[8192]{0}', space=vmem, size = 0x2000, scoped, tag = 'input window, operand 0, single buffered']
    #allocation3 [shape = 's32[1]{0}', space=sflag, size = 0x4, scoped, tag = 'scoped memory for tpu_custom_call.1']
    #allocation4 [shape = 's32[1]{0}', space=sflag, size = 0x4, scoped, tag = 'scoped memory for tpu_custom_call.1']
    #allocation5 [shape = 'u8[16384]{0}', space=vmem, size = 0x4000, scoped, tag = 'input window, operand 1, single buffered']
    #allocation6 [shape = 's32[1]{0}', space=sflag, size = 0x4, scoped, tag = 'scoped memory for tpu_custom_call.1']
    #allocation7 [shape = 'u8[8192]{0}', space=vmem, size = 0x2000, scoped, tag = 'input window, operand 5, single buffered']
    #allocation8 [shape = 'u8[16384]{0}', space=vmem, size = 0x4000, scoped, tag = 'output window, operand 0, single buffered']
    %11 = vsyncpa [#allocation3], 0
    %12 = vsyncpa [#allocation6], 0
    %13 = vsyncpa [#allocation4], 0
    // Predicated region
    $region2: #{tpu_custom_call.1} parent=1 // pred_check
      _
    $region3: #{tpu_custom_call.1} parent=1 // pred_check_branch
      %15 = sbr.rel (0) target = $region5
    $region4: #{tpu_custom_call.1} parent=1 // pred_region
      %s17 = ssub.s32 256, 256
      %18 = vsyncadd [#allocation3], %s17
      %s19 = sshll.u32 [#allocation2], 4
      %s20 = int_to_ptr.vmem [resolvable:$true] %s19
      %25 = dma.hbm_to_vmem [thread:$0]  %s0, 256, %s20, [#allocation3], 128, 128, 8
    $region5: #{tpu_custom_call.1} parent=1 // pred_fallthru
      _
    // Predicated region
    $region6: #{tpu_custom_call.1} parent=1 // pred_check
      _
    $region7: #{tpu_custom_call.1} parent=1 // pred_check_branch
      %27 = sbr.rel (0) target = $region9
    $region8: #{tpu_custom_call.1} parent=1 // pred_region
      %s29 = ssub.s32 512, 512
      %30 = vsyncadd [#allocation6], %s29
      %s31 = sshll.u32 [#allocation5], 4
      %s32 = int_to_ptr.vmem [resolvable:$true] %s31
      %37 = dma.hbm_to_vmem [thread:$0]  %s1, 512, %s32, [#allocation6], 128, 128, 8
    $region9: #{tpu_custom_call.1} parent=1 // pred_fallthru
      _
    // Predicated region
    $region10: #{tpu_custom_call.1} parent=1 // pred_check
      _
    $region11: #{tpu_custom_call.1} parent=1 // pred_check_branch
      %39 = sbr.rel (0) target = $region13
    $region12: #{tpu_custom_call.1} parent=1 // pred_region
      _
    $region13: #{tpu_custom_call.1} parent=1 // pred_fallthru
      _
    // Predicated region
    $region14: #{tpu_custom_call.1} parent=1 // pred_check
      _
    $region15: #{tpu_custom_call.1} parent=1 // pred_check_branch
      %41 = sbr.rel (0) target = $region17
    $region16: #{tpu_custom_call.1} parent=1 // pred_region
      _
    $region17: #{tpu_custom_call.1} parent=1 // pred_fallthru
      _
    // Predicated region
    $region18: #{tpu_custom_call.1} parent=1 // pred_check
      _
    $region19: #{tpu_custom_call.1} parent=1 // pred_check_branch
      %43 = sbr.rel (0) target = $region21
    $region20: #{tpu_custom_call.1} parent=1 // pred_region
      _
    $region21: #{tpu_custom_call.1} parent=1 // pred_fallthru
      _
    // Predicated region
    $region22: #{tpu_custom_call.1} parent=1 // pred_check
      _
    $region23: #{tpu_custom_call.1} parent=1 // pred_check_branch
      %45 = sbr.rel (0) target = $region25
    $region24: #{tpu_custom_call.1} parent=1 // pred_region
      %s47 = ssub.s32 256, 256
      %48 = vsyncadd [#allocation6], %s47
      %s50 = sshll.u32 [#allocation7], 4
      %s51 = int_to_ptr.vmem [resolvable:$true] %s50
      %53 = dma.hbm_to_vmem [thread:$0]  %s5, 256, %s51, [#allocation6]
    $region25: #{tpu_custom_call.1} parent=1 // pred_fallthru
      _
    // Predicated region
    $region26: #{tpu_custom_call.1} parent=1 // pred_check
      _
    $region27: #{tpu_custom_call.1} parent=1 // pred_check_branch
      %55 = sbr.rel (0) target = $region29
    $region28: #{tpu_custom_call.1} parent=1 // pred_region
      %56 = dma.done [#allocation3], 256
    $region29: #{tpu_custom_call.1} parent=1 // pred_fallthru
      _
    // Predicated region
    $region30: #{tpu_custom_call.1} parent=1 // pred_check
      _
    $region31: #{tpu_custom_call.1} parent=1 // pred_check_branch
      %58 = sbr.rel (0) target = $region33
    $region32: #{tpu_custom_call.1} parent=1 // pred_region
      %59 = dma.done [#allocation6], 512
    $region33: #{tpu_custom_call.1} parent=1 // pred_fallthru
      _
    // Predicated region
    $region34: #{tpu_custom_call.1} parent=1 // pred_check
      _
    $region35: #{tpu_custom_call.1} parent=1 // pred_check_branch
      %61 = sbr.rel (0) target = $region37
    $region36: #{tpu_custom_call.1} parent=1 // pred_region
      %62 = dma.done [#allocation6], 256
    $region37: #{tpu_custom_call.1} parent=1 // pred_fallthru
      _
    %v64 = vld [vmem:[#allocation2] sm:$0xff]
    %v65 = vld [vmem:[#allocation2 + $0x8] sm:$0xff]
    %v66 = vpack.c.bf16 %v65, %v64
    %v67 = vld [vmem:[#allocation5] sm:$0xff]
    %v68 = vld [vmem:[#allocation5 + $0x8] sm:$0xff]
    %v69 = vld [vmem:[#allocation5 + $0x10] sm:$0xff]
    %v70 = vld [vmem:[#allocation5 + $0x18] sm:$0xff]
    %v71 = vld [vmem:[%s2] sm:$0x3]
    %v73 = vlaneseq
    %v74 = vshrl.u32 %v73, 7
    %v75 = vsub.s32 0, %v74
    %v76 = vrot.slane %v71, %v75
    %v77 = vlaneseq
    %v78 = vshrl.u32 %v77, 7
    %v79 = vsub.s32 1, %v78
    %v80 = vrot.slane %v71, %v79
    %v87 = vunpack.c.l.b16 %v67
    %v88 = vunpack.c.h.b16 %v67
    %v89 = vunpack.c.l.b16 %v68
    %v90 = vunpack.c.h.b16 %v68
    %v91 = vunpack.c.l.b16 %v69
    %v92 = vunpack.c.h.b16 %v69
    %v93 = vunpack.c.l.b16 %v70
    %v94 = vunpack.c.h.b16 %v70
    %v95 = vpack.c.b16 %v89, %v87
    %v96 = vpack.c.b16 %v90, %v88
    %v97 = vpack.c.b16 %v93, %v91
    %v98 = vpack.c.b16 %v94, %v92
    %vm103 = vcmask 261120
    %v105 = vsel %vm103, %v66, 0
    %107 = vmatprep.subr.bf16.mxu0 0
    %108 = vmatpush1.bf16.msra.mxu0 0
    %109 = vmatprep.subr.bf16.mxu0 0
    %110 = vmatpush1.bf16.msra.mxu0 0
    %111 = vmatprep.subr.bf16.mxu0 0
    %112 = vmatpush1.bf16.msra.mxu0 0
    %113 = vmatprep.subr.bf16.mxu0 0
    %114 = vmatpush1.bf16.msra.mxu0 0
    %115 = vmatprep.subr.bf16.mxu0 0
    %116 = vmatpush1.bf16.msra.mxu0 0
    %117 = vmatprep.subr.bf16.mxu0 0
    %118 = vmatpush1.bf16.msra.mxu0 0
    %119 = vmatprep.subr.bf16.mxu0 %v98
    %120 = vmatpush1.bf16.msra.mxu0 %v97
    %121 = vmatprep.subr.bf16.mxu0 %v96
    %122 = vmatpush1.bf16.msra.mxu0 %v95
    %123 = vmatprep.subr.bf16.mxu0 0
    %124 = vmatpush2.bf16.msra.mxu0 0
    %125 = vmatprep.subr.bf16.mxu0 0
    %126 = vmatpush2.bf16.msra.mxu0 0
    %127 = vmatprep.subr.bf16.mxu0 0
    %128 = vmatpush2.bf16.msra.mxu0 0
    %129 = vmatprep.subr.bf16.mxu0 0
    %130 = vmatpush2.bf16.msra.mxu0 0
    %131 = vmatprep.subr.bf16.mxu0 0
    %132 = vmatpush2.bf16.msra.mxu0 0
    %133 = vmatprep.subr.bf16.mxu0 0
    %134 = vmatpush2.bf16.msra.mxu0 0
    %135 = vmatprep.subr.bf16.mxu0 0
    %136 = vmatpush2.bf16.msra.mxu0 0
    %137 = vmatprep.subr.bf16.mxu0 0
    %138 = vmatpush2.bf16.msra.mxu0 0
    %139 = vmatprep.mubr.bf16.mxu0 0
    %140 = vmatmul.mubr.bf16.gmra.mxu0 %v105
    %v141 = vpop.f32.mrf.mxu0
    %v142 = vadd.f32 %v76, %v141
    %v143 = vpop.f32.mrf.mxu0
    %v144 = vadd.f32 %v80, %v143
    %v145 = vpop.f32.mrf.mxu0
    %v146 = vadd.f32 %v76, %v145
    %v147 = vpop.f32.mrf.mxu0
    %v148 = vadd.f32 %v80, %v147
    %149 = vdwg.mxu0
    %v150 = vld [vmem:[%s3] sm:$0x3]
    %v151 = vld [vmem:[%s4] sm:$0x3]
    %v152 = vadd.f32 %v142, %v144
    %153 = vadd.xlane.f32.xlu0 %v152
    %v154 = vpop.xlane.xlu0 %153
    %v155 = vadd.f32 %v146, %v148
    %156 = vadd.xlane.f32.xlu0 %v155
    %v157 = vpop.xlane.xlu0 %156
    %v158 = vmul.f32 %v154, 0.00390625
    %v159 = vmul.f32 %v157, 0.00390625
    %v160 = vsub.f32 %v142, %v158
    %v161 = vsub.f32 %v144, %v158
    %v162 = vsub.f32 %v146, %v159
    %v163 = vsub.f32 %v148, %v159
    %v164 = vmul.f32 %v160, %v160
    %v165 = vmul.f32 %v161, %v161
    %v166 = vmul.f32 %v162, %v162
    %v167 = vmul.f32 %v163, %v163
    %v168 = vadd.f32 %v164, %v165
    %169 = vadd.xlane.f32.xlu0 %v168
    %v170 = vpop.xlane.xlu0 %169
    %v171 = vadd.f32 %v166, %v167
    %172 = vadd.xlane.f32.xlu0 %v171
    %v173 = vpop.xlane.xlu0 %172
    %v174 = vmul.f32 %v170, 0.003921569
    %v175 = vmul.f32 %v173, 0.003921569
    %v176 = vrsqrt.pop %v174
    %v177 = vmul.f32 %v174, %v176
    %vm178 = vcmp.eq.f32.partialorder %v174, inf
    %v179 = vsel %vm178, %v174, %v177
    %vm180 = vcmp.eq.f32.partialorder %v174, 0.0
    %v181 = vand.u32 %v174, 2147483648
    %v182 = vsel %vm180, %v181, %v179
    %v183 = vrsqrt.pop %v175
    %v184 = vmul.f32 %v175, %v183
    %vm185 = vcmp.eq.f32.partialorder %v175, inf
    %v186 = vsel %vm185, %v175, %v184
    %vm187 = vcmp.eq.f32.partialorder %v175, 0.0
    %v188 = vand.u32 %v175, 2147483648
    %v189 = vsel %vm187, %v188, %v186
    %v190 = vadd.f32 %v182, 1e-06
    %v191 = vadd.f32 %v189, 1e-06
    %v192 = vrcp.pop %v190
    %v193 = vmul.f32 1.0, %v192
    %v194 = vrcp.pop %v191
    %v195 = vmul.f32 1.0, %v194
    %v196 = vmul.f32 %v160, %v193
    %v197 = vmul.f32 %v161, %v193
    %v198 = vmul.f32 %v162, %v195
    %v199 = vmul.f32 %v163, %v195
    %v201 = vlaneseq
    %v202 = vshrl.u32 %v201, 7
    %v203 = vsub.s32 0, %v202
    %v204 = vrot.slane %v150, %v203
    %v205 = vlaneseq
    %v206 = vshrl.u32 %v205, 7
    %v207 = vsub.s32 1, %v206
    %v208 = vrot.slane %v150, %v207
    %v211 = vmul.f32 %v196, %v204
    %v212 = vmul.f32 %v197, %v208
    %v213 = vmul.f32 %v198, %v204
    %v214 = vmul.f32 %v199, %v208
    %v216 = vlaneseq
    %v217 = vshrl.u32 %v216, 7
    %v218 = vsub.s32 0, %v217
    %v219 = vrot.slane %v151, %v218
    %v220 = vlaneseq
    %v221 = vshrl.u32 %v220, 7
    %v222 = vsub.s32 1, %v221
    %v223 = vrot.slane %v151, %v222
    %v226 = vadd.f32 %v211, %v219
    %v227 = vadd.f32 %v212, %v223
    %v228 = vadd.f32 %v213, %v219
    %v229 = vadd.f32 %v214, %v223
    %v230 = vld [vmem:[#allocation7] sm:$0xff]
    %v231 = vld [vmem:[#allocation7 + $0x8] sm:$0xff]
    %v232 = vadd.f32 %v226, %v230
    %v233 = vadd.f32 %v227, %v231
    %v234 = vadd.f32 %v228, %v230
    %v235 = vadd.f32 %v229, %v231
    %236 = vst [vmem:[#allocation8] sm:$0xff] %v232
    %237 = vst [vmem:[#allocation8 + $0x8] sm:$0xff] %v233
    %238 = vst [vmem:[#allocation8 + $0x10] sm:$0xff] %v234
    %239 = vst [vmem:[#allocation8 + $0x18] sm:$0xff] %v235
    // Predicated region
    $region38: #{tpu_custom_call.1} parent=1 // pred_check
      _
    $region39: #{tpu_custom_call.1} parent=1 // pred_check_branch
      %241 = sbr.rel (0) target = $region41
    $region40: #{tpu_custom_call.1} parent=1 // pred_region
      %s243 = ssub.s32 512, 512
      %244 = vsyncadd [#allocation4], %s243
      %s245 = sshll.u32 [#allocation8], 4
      %s246 = int_to_ptr.vmem [resolvable:$true] %s245
      %251 = dma.vmem_to_hbm [thread:$0]  %s246, 512, %s6, [#allocation4], 256, 256, 16
    $region41: #{tpu_custom_call.1} parent=1 // pred_fallthru
      _
    // Predicated region
    $region42: #{tpu_custom_call.1} parent=1 // pred_check
      _
    $region43: #{tpu_custom_call.1} parent=1 // pred_check_branch
      %253 = sbr.rel (0) target = $region45
    $region44: #{tpu_custom_call.1} parent=1 // pred_region
      %254 = dma.done [#allocation4], 512
    $region45: #{tpu_custom_call.1} parent=1 // pred_fallthru
      _
    %255 = vsyncpa [#allocation3], 1
    %256 = vsyncpa [#allocation6], 1
    %257 = vsyncpa [#allocation4], 1

</llo_original>
